<compile_context>
chip_gen: v6e
topology: v6e:2x2x1
jax: 0.10.0
libtpu: 0.0.40
codegen_flags: <defaults>
</compile_context>

<pallas_src>
import jax
import jax.numpy as jnp
from jax.experimental import pallas as pl
from jax.experimental.pallas import tpu as pltpu

BN_EPS = 1e-5


def make_netwrapper_kernel(rep_dim, hidden, proj_size):
    def kernel(x_ref, w1_ref, wp1_ref, wp2_ref, vec_ref, proj_ref, rep_ref):
        # Unpack the stacked bias/BN vectors (single small DMA, sliced in-reg).
        vec = vec_ref[...]                       # (4, vec_w) f32
        b1 = vec[0:1, :rep_dim]
        gamma = vec[1:2, :hidden]
        beta = vec[2:3, :hidden]
        bp2 = vec[3:4, :proj_size]

        # --- backbone up to hooked layer (-2): Linear + ReLU, flattened ---
        # bf16 MXU operands, f32 accumulation; elementwise math in f32.
        x_bf = x_ref[...].astype(jnp.bfloat16)
        h = jnp.dot(x_bf, w1_ref[...], preferred_element_type=jnp.float32)
        h = jnp.maximum(h + b1, 0.0)             # (B, rep_dim) f32
        rep_ref[...] = h

        # --- projector MLP: Linear -> BatchNorm1d (train) -> ReLU -> Linear ---
        # bp1 (first projector-Linear bias) is omitted: it cancels exactly in
        # the BatchNorm mean subtraction.
        z = jnp.dot(h.astype(jnp.bfloat16), wp1_ref[...],
                    preferred_element_type=jnp.float32)     # (B, hidden) f32
        mean = jnp.mean(z, axis=0, keepdims=True)
        c = z - mean
        var = jnp.mean(c * c, axis=0, keepdims=True)          # biased batch var
        # Fold BN (normalize + affine) into one scale/shift pass.
        scale = gamma * jax.lax.rsqrt(var + BN_EPS)
        shift = beta - mean * scale
        a = jnp.maximum(z * scale + shift, 0.0)
        proj_ref[...] = (jnp.dot(a.astype(jnp.bfloat16), wp2_ref[...],
                                 preferred_element_type=jnp.float32) + bp2)
        # TODO(synk): BatchNorm1d running_mean/running_var momentum updates
        # (PyTorch training-mode side effect) are intentionally not emitted;
        # this is a pure forward pass.
    return kernel


def pack_params(params):
    """One-time pre-pack: bf16 weight casts + stacked bias/BN vectors.

    Done ONCE at setup, so the per-call path emits no pad/convert XLA ops.
    """
    W1, b1, Wp1, bp1, gamma, beta, Wp2, bp2 = params
    del bp1  # cancels exactly in the BatchNorm mean subtraction
    rep_dim, hidden, proj_size = W1.shape[1], Wp1.shape[1], Wp2.shape[1]
    vec_w = max(rep_dim, hidden, proj_size)

    def row(v):
        v = jnp.asarray(v, jnp.float32).reshape(-1)
        return jnp.pad(v, (0, vec_w - v.shape[0]))

    vec = jnp.stack([row(b1), row(gamma), row(beta), row(bp2)])   # (4, vec_w)
    return (W1.astype(jnp.bfloat16),
            Wp1.astype(jnp.bfloat16),
            Wp2.astype(jnp.bfloat16),
            vec)


def netwrapper_forward(x, packed):
    """Returns (projection, representation), matching NetWrapper.forward."""
    W1, Wp1, Wp2, vec = packed
    B = x.shape[0]
    dim_in, rep_dim = W1.shape
    hidden = Wp1.shape[1]
    proj_size = Wp2.shape[1]

    x_flat = x.reshape(B, -1).astype(jnp.float32)
    assert x_flat.shape[1] == dim_in

    kernel = make_netwrapper_kernel(rep_dim, hidden, proj_size)
    vmem = pl.BlockSpec(memory_space=pltpu.MemorySpace.VMEM)

    flops = 2 * B * (dim_in * rep_dim + rep_dim * hidden + hidden * proj_size)
    bytes_accessed = (x_flat.size * 4 + W1.size * 2 + Wp1.size * 2 + Wp2.size * 2
                      + vec.size * 4 + B * (rep_dim + proj_size) * 4)
    cost = pl.CostEstimate(flops=flops, transcendentals=hidden,
                           bytes_accessed=bytes_accessed)

    proj, rep = pl.pallas_call(
        kernel,
        out_shape=(
            jax.ShapeDtypeStruct((B, proj_size), jnp.float32),  # projection
            jax.ShapeDtypeStruct((B, rep_dim), jnp.float32),    # representation
        ),
        in_specs=[vmem] * 5,
        out_specs=(vmem, vmem),
        cost_estimate=cost,
    )(x_flat, W1, Wp1, Wp2, vec)
    return proj, rep


def _reference_bf16(x, params):
    """Pure-JAX reference with the SAME bf16 matmul-operand casts as the kernel."""
    W1, b1, Wp1, bp1, gamma, beta, Wp2, bp2 = params
    x_flat = x.reshape(x.shape[0], -1).astype(jnp.float32)
    h = jnp.maximum(
        jnp.dot(x_flat.astype(jnp.bfloat16), W1.astype(jnp.bfloat16),
                preferred_element_type=jnp.float32) + b1, 0.0)
    z = jnp.dot(h.astype(jnp.bfloat16), Wp1.astype(jnp.bfloat16),
                preferred_element_type=jnp.float32) + bp1
    mean = z.mean(axis=0, keepdims=True)
    var = ((z - mean) ** 2).mean(axis=0, keepdims=True)
    zn = (z - mean) / jnp.sqrt(var + BN_EPS) * gamma + beta
    a = jnp.maximum(zn, 0.0)
    proj = jnp.dot(a.astype(jnp.bfloat16), Wp2.astype(jnp.bfloat16),
                   preferred_element_type=jnp.float32) + bp2
    return proj, h


def _reference_f32(x, params):
    """Pure-f32 reference of the original module semantics."""
    W1, b1, Wp1, bp1, gamma, beta, Wp2, bp2 = params
    x_flat = x.reshape(x.shape[0], -1).astype(jnp.float32)
    h = jnp.maximum(x_flat @ W1 + b1, 0.0)
    z = h @ Wp1 + bp1
    mean = z.mean(axis=0, keepdims=True)
    var = ((z - mean) ** 2).mean(axis=0, keepdims=True)
    zn = (z - mean) / jnp.sqrt(var + BN_EPS) * gamma + beta
    a = jnp.maximum(zn, 0.0)
    return a @ Wp2 + bp2, h


def init_params(key, dim_in, rep_dim, proj_hidden, proj_size):
    k1, k2, k3, k4, k5, k6 = jax.random.split(key, 6)
    W1 = jax.random.normal(k1, (dim_in, rep_dim), jnp.float32) * (1.0 / jnp.sqrt(dim_in))
    b1 = jax.random.normal(k2, (rep_dim,), jnp.float32) * 0.01
    Wp1 = jax.random.normal(k3, (rep_dim, proj_hidden), jnp.float32) * (1.0 / jnp.sqrt(rep_dim))
    bp1 = jax.random.normal(k4, (proj_hidden,), jnp.float32) * 0.01
    gamma = jnp.ones((proj_hidden,), jnp.float32)    # BatchNorm1d default init
    beta = jnp.zeros((proj_hidden,), jnp.float32)
    Wp2 = jax.random.normal(k5, (proj_hidden, proj_size), jnp.float32) * (1.0 / jnp.sqrt(proj_hidden))
    bp2 = jax.random.normal(k6, (proj_size,), jnp.float32) * 0.01
    return (W1, b1, Wp1, bp1, gamma, beta, Wp2, bp2)


if __name__ == "__main__":
    # Small shapes consistent with the module's forward.
    B, C, H, W = 2, 4, 16, 16
    rep_dim = 64               # backbone hidden width (dim inferred by projector)
    proj_hidden = 128          # projection_hidden_size (4096 in real BYOL; small here)
    proj_size = 32             # projection_size

    key = jax.random.PRNGKey(0)
    kx, kp = jax.random.split(key)
    x = jax.random.normal(kx, (B, C, H, W), jnp.float32)
    params = init_params(kp, C * H * W, rep_dim, proj_hidden, proj_size)

    # One-time pre-pack (hoisted out of the per-call path).
    packed = jax.block_until_ready(pack_params(params))

    fwd = jax.jit(netwrapper_forward)
    projection, representation = fwd(x, packed)
    jax.block_until_ready((projection, representation))

    assert projection.shape == (B, proj_size)
    assert representation.shape == (B, rep_dim)
    assert bool(jnp.all(jnp.isfinite(projection)))
    assert bool(jnp.all(jnp.isfinite(representation)))

    # Match against a reference that uses the same bf16 matmul-operand casts.
    proj_ref, rep_ref = _reference_bf16(x, params)
    assert jnp.allclose(projection, proj_ref, atol=5e-3, rtol=5e-3)
    assert jnp.allclose(representation, rep_ref, atol=5e-3, rtol=5e-3)

    # Sanity check of module semantics vs. pure-f32 reference on the
    # well-conditioned representation branch (bf16 weights => looser tolerance).
    _, rep_f32 = _reference_f32(x, params)
    assert jnp.allclose(representation, rep_f32, atol=5e-2, rtol=5e-2)

    print("KERNEL_OK")
</pallas_src>

<mosaic_0001>
module attributes {stable_mosaic.version = 11 : i64} {
  func.func @kernel(%arg0: memref<2x1024xf32, #tpu.memory_space<vmem>>, %arg1: memref<1024x64xbf16, #tpu.memory_space<vmem>>, %arg2: memref<64x128xbf16, #tpu.memory_space<vmem>>, %arg3: memref<128x32xbf16, #tpu.memory_space<vmem>>, %arg4: memref<4x128xf32, #tpu.memory_space<vmem>>, %arg5: memref<2x32xf32, #tpu.memory_space<vmem>>, %arg6: memref<2x64xf32, #tpu.memory_space<vmem>>) attributes {dimension_semantics = [], scalar_prefetch = 0 : i64, scratch_operands = 0 : i64, tpu.core_type = #tpu.core_type<tc>} {
    %c0 = arith.constant 0 : index
    %c0_0 = arith.constant 0 : index
    %0 = vector.load %arg4[%c0, %c0_0] : memref<4x128xf32, #tpu.memory_space<vmem>>, vector<4x128xf32>
    %1 = vector.extract_strided_slice %0 {offsets = [0, 0], sizes = [1, 64], strides = [1, 1]} : vector<4x128xf32> to vector<1x64xf32>
    %2 = vector.extract_strided_slice %0 {offsets = [1, 0], sizes = [1, 128], strides = [1, 1]} : vector<4x128xf32> to vector<1x128xf32>
    %3 = vector.extract_strided_slice %0 {offsets = [2, 0], sizes = [1, 128], strides = [1, 1]} : vector<4x128xf32> to vector<1x128xf32>
    %4 = vector.extract_strided_slice %0 {offsets = [3, 0], sizes = [1, 32], strides = [1, 1]} : vector<4x128xf32> to vector<1x32xf32>
    %c0_1 = arith.constant 0 : index
    %c0_2 = arith.constant 0 : index
    %5 = vector.load %arg0[%c0_1, %c0_2] : memref<2x1024xf32, #tpu.memory_space<vmem>>, vector<2x1024xf32>
    %6 = arith.truncf %5 : vector<2x1024xf32> to vector<2x1024xbf16>
    %c0_3 = arith.constant 0 : index
    %c0_4 = arith.constant 0 : index
    %7 = vector.load %arg1[%c0_3, %c0_4] : memref<1024x64xbf16, #tpu.memory_space<vmem>>, vector<1024x64xbf16>
    %cst = arith.constant dense<0.000000e+00> : vector<2x64xf32>
    %8 = tpu.matmul %6, %7, %cst {dimension_numbers = #tpu.dot_dimension_numbers<[1], [0], [0], [1], [0, 0, 1, 1], [], []>} : vector<2x1024xbf16>, vector<1024x64xbf16>, vector<2x64xf32> -> vector<2x64xf32>
    %9 = vector.broadcast %1 : vector<1x64xf32> to vector<2x64xf32>
    %10 = arith.addf %8, %9 : vector<2x64xf32>
    %cst_5 = arith.constant 0.000000e+00 : f32
    %11 = vector.broadcast %cst_5 : f32 to vector<2x64xf32>
    %12 = arith.maximumf %10, %11 : vector<2x64xf32>
    %c0_6 = arith.constant 0 : index
    %c0_7 = arith.constant 0 : index
    %13 = vector.load %arg6[%c0_6, %c0_7] : memref<2x64xf32, #tpu.memory_space<vmem>>, vector<2x64xf32>
    tpu.vector_store %arg6[%c0_6, %c0_7], %12 {strides = array<i32>} : memref<2x64xf32, #tpu.memory_space<vmem>>, vector<2x64xf32>,
    %14 = arith.truncf %12 : vector<2x64xf32> to vector<2x64xbf16>
    %c0_8 = arith.constant 0 : index
    %c0_9 = arith.constant 0 : index
    %15 = vector.load %arg2[%c0_8, %c0_9] : memref<64x128xbf16, #tpu.memory_space<vmem>>, vector<64x128xbf16>
    %cst_10 = arith.constant dense<0.000000e+00> : vector<2x128xf32>
    %16 = tpu.matmul %14, %15, %cst_10 {dimension_numbers = #tpu.dot_dimension_numbers<[1], [0], [0], [1], [0, 0, 1, 1], [], []>} : vector<2x64xbf16>, vector<64x128xbf16>, vector<2x128xf32> -> vector<2x128xf32>
    %cst_11 = arith.constant dense<0.000000e+00> : vector<128xf32>
    %17 = vector.multi_reduction <add>, %16, %cst_11 [0] : vector<2x128xf32> to vector<128xf32>
    %18 = vector.shape_cast %17 : vector<128xf32> to vector<1x128xf32>
    %cst_12 = arith.constant 2.000000e+00 : f32
    %19 = vector.broadcast %cst_12 : f32 to vector<1x128xf32>
    %20 = arith.divf %18, %19 : vector<1x128xf32>
    %21 = vector.broadcast %20 : vector<1x128xf32> to vector<2x128xf32>
    %22 = arith.subf %16, %21 : vector<2x128xf32>
    %23 = arith.mulf %22, %22 : vector<2x128xf32>
    %cst_13 = arith.constant dense<0.000000e+00> : vector<128xf32>
    %24 = vector.multi_reduction <add>, %23, %cst_13 [0] : vector<2x128xf32> to vector<128xf32>
    %25 = vector.shape_cast %24 : vector<128xf32> to vector<1x128xf32>
    %cst_14 = arith.constant 2.000000e+00 : f32
    %26 = vector.broadcast %cst_14 : f32 to vector<1x128xf32>
    %27 = arith.divf %25, %26 : vector<1x128xf32>
    %cst_15 = arith.constant 9.99999974E-6 : f32
    %28 = vector.broadcast %cst_15 : f32 to vector<1x128xf32>
    %29 = arith.addf %27, %28 : vector<1x128xf32>
    %30 = math.rsqrt %29 : vector<1x128xf32>
    %31 = arith.mulf %2, %30 : vector<1x128xf32>
    %32 = arith.mulf %20, %31 : vector<1x128xf32>
    %33 = arith.subf %3, %32 : vector<1x128xf32>
    %34 = vector.broadcast %31 : vector<1x128xf32> to vector<2x128xf32>
    %35 = arith.mulf %16, %34 : vector<2x128xf32>
    %36 = vector.broadcast %33 : vector<1x128xf32> to vector<2x128xf32>
    %37 = arith.addf %35, %36 : vector<2x128xf32>
    %cst_16 = arith.constant 0.000000e+00 : f32
    %38 = vector.broadcast %cst_16 : f32 to vector<2x128xf32>
    %39 = arith.maximumf %37, %38 : vector<2x128xf32>
    %40 = arith.truncf %39 : vector<2x128xf32> to vector<2x128xbf16>
    %c0_17 = arith.constant 0 : index
    %c0_18 = arith.constant 0 : index
    %41 = vector.load %arg3[%c0_17, %c0_18] : memref<128x32xbf16, #tpu.memory_space<vmem>>, vector<128x32xbf16>
    %cst_19 = arith.constant dense<0.000000e+00> : vector<2x32xf32>
    %42 = tpu.matmul %40, %41, %cst_19 {dimension_numbers = #tpu.dot_dimension_numbers<[1], [0], [0], [1], [0, 0, 1, 1], [], []>} : vector<2x128xbf16>, vector<128x32xbf16>, vector<2x32xf32> -> vector<2x32xf32>
    %43 = vector.broadcast %4 : vector<1x32xf32> to vector<2x32xf32>
    %44 = arith.addf %42, %43 : vector<2x32xf32>
    %c0_20 = arith.constant 0 : index
    %c0_21 = arith.constant 0 : index
    %45 = vector.load %arg5[%c0_20, %c0_21] : memref<2x32xf32, #tpu.memory_space<vmem>>, vector<2x32xf32>
    tpu.vector_store %arg5[%c0_20, %c0_21], %44 {strides = array<i32>} : memref<2x32xf32, #tpu.memory_space<vmem>>, vector<2x32xf32>,
    return
  }
}

</mosaic_0001>

<llo_original>
// kernel: netwrapper_forward.1
$region0: #{netwrapper_forward.1}
  #allocation0 [shape = 'u32[]', space=smem, size = 0x4, offset = 0x4, fixed_abs, tag = 'smem constant byte address 0x4 - core index']
  #allocation1 [shape = 'u32[144,128]{1,0:T(1,128)}', space=vmem, size = 0x12000, scoped, tag = 'internal scratch']
  %s0 = inlined_call_operand.vmem [shape: f32[2,1024], index: 0, kind: input, shape index: {}]
  %s1 = inlined_call_operand.vmem [shape: bf16[1024,64], index: 1, kind: input, shape index: {}]
  %s2 = inlined_call_operand.vmem [shape: bf16[64,128], index: 2, kind: input, shape index: {}]
  %s3 = inlined_call_operand.vmem [shape: bf16[128,32], index: 3, kind: input, shape index: {}]
  %s4 = inlined_call_operand.vmem [shape: f32[4,128], index: 4, kind: input, shape index: {}]
  %s5 = inlined_call_operand.hbm [shape: f32[2,32], index: 5, kind: output, shape index: {0}]
  %s6 = inlined_call_operand.hbm [shape: f32[2,64], index: 6, kind: output, shape index: {1}]
  %7 = xla_tuple %s5, %s6
  %s8 = sld [smem:[#allocation0]]
  $region38: #{netwrapper_forward.1} parent=0
    _
  %s10 = ssub.s32 1, %s8
  %s11 = scalar_select 0, %s10, %s8
  $region1: #{netwrapper_forward.1} parent=0
    #allocation2 [shape = 'u8[1024]{0}', space=vmem, size = 0x400, scoped, tag = 'output window, operand 0, single buffered']
    #allocation3 [shape = 's32[1]{0}', space=sflag, size = 0x4, scoped, tag = 'scoped memory for netwrapper_forward.1']
    #allocation4 [shape = 'u8[1024]{0}', space=vmem, size = 0x400, scoped, tag = 'output window, operand 1, single buffered']
    #allocation5 [shape = 's32[1]{0}', space=sflag, size = 0x4, scoped, tag = 'scoped memory for netwrapper_forward.1']
    %12 = vsyncpa [#allocation3], 0
    %13 = vsyncpa [#allocation5], 0
    // Predicated region
    $region2: #{netwrapper_forward.1} parent=1 // pred_check
      _
    $region3: #{netwrapper_forward.1} parent=1 // pred_check_branch
      %15 = sbr.rel (0) target = $region5
    $region4: #{netwrapper_forward.1} parent=1 // pred_region
      _
    $region5: #{netwrapper_forward.1} parent=1 // pred_fallthru
      _
    // Predicated region
    $region6: #{netwrapper_forward.1} parent=1 // pred_check
      _
    $region7: #{netwrapper_forward.1} parent=1 // pred_check_branch
      %17 = sbr.rel (0) target = $region9
    $region8: #{netwrapper_forward.1} parent=1 // pred_region
      _
    $region9: #{netwrapper_forward.1} parent=1 // pred_fallthru
      _
    // Predicated region
    $region10: #{netwrapper_forward.1} parent=1 // pred_check
      _
    $region11: #{netwrapper_forward.1} parent=1 // pred_check_branch
      %19 = sbr.rel (0) target = $region13
    $region12: #{netwrapper_forward.1} parent=1 // pred_region
      _
    $region13: #{netwrapper_forward.1} parent=1 // pred_fallthru
      _
    // Predicated region
    $region14: #{netwrapper_forward.1} parent=1 // pred_check
      _
    $region15: #{netwrapper_forward.1} parent=1 // pred_check_branch
      %21 = sbr.rel (0) target = $region17
    $region16: #{netwrapper_forward.1} parent=1 // pred_region
      _
    $region17: #{netwrapper_forward.1} parent=1 // pred_fallthru
      _
    // Predicated region
    $region18: #{netwrapper_forward.1} parent=1 // pred_check
      _
    $region19: #{netwrapper_forward.1} parent=1 // pred_check_branch
      %23 = sbr.rel (0) target = $region21
    $region20: #{netwrapper_forward.1} parent=1 // pred_region
      _
    $region21: #{netwrapper_forward.1} parent=1 // pred_fallthru
      _
    %v25 = vld [vmem:[%s4] sm:$0xf]
    %v26 = vld [vmem:[%s0] sm:$0xff]
    %v27 = vld [vmem:[%s0 + $0x8] sm:$0xff]
    %v30 = vcombine.high %v26, %v26
    %v32 = vunpack.c.l.s4 1983009808
    %v33 = vunpack.c.0.s8 %v32
    %v34 = vlaneseq
    %v35 = vshrl.u32 %v34, 7
    %v36 = vsub.s32 %v33, %v35
    %v37 = vrot.slane %v26, %v36
    %v39 = vunpack.c.l.s4 1983009808
    %v40 = vunpack.c.0.s8 %v39
    %v41 = vlaneseq
    %v42 = vshrl.u32 %v41, 7
    %v43 = vsub.s32 %v40, %v42
    %v44 = vrot.slane %v30, %v43
    %v45 = vcombine.high %v37, %v37
    %v46 = vcombine.high %v44, %v44
    %v47 = vcombine.high %v27, %v27
    %v49 = vunpack.c.l.s4 1983009808
    %v50 = vunpack.c.0.s8 %v49
    %v51 = vlaneseq
    %v52 = vshrl.u32 %v51, 7
    %v53 = vsub.s32 %v50, %v52
    %v54 = vrot.slane %v27, %v53
    %v56 = vunpack.c.l.s4 1983009808
    %v57 = vunpack.c.0.s8 %v56
    %v58 = vlaneseq
    %v59 = vshrl.u32 %v58, 7
    %v60 = vsub.s32 %v57, %v59
    %v61 = vrot.slane %v47, %v60
    %v62 = vcombine.high %v54, %v54
    %v63 = vcombine.high %v61, %v61
    %v72 = vpack.c.bf16 %v37, %v37
    %v73 = vpack.c.bf16 %v45, %v45
    %v74 = vpack.c.bf16 %v44, %v44
    %v75 = vpack.c.bf16 %v46, %v46
    %v76 = vpack.c.bf16 %v54, %v54
    %v77 = vpack.c.bf16 %v62, %v62
    %v78 = vpack.c.bf16 %v61, %v61
    %v79 = vpack.c.bf16 %v63, %v63
    %v80 = vld [vmem:[%s1] sm:$0xf]
    %v81 = vld [vmem:[%s1 + $0x4] sm:$0xf]
    %v82 = vld [vmem:[%s1 + $0x8] sm:$0xf]
    %v83 = vld [vmem:[%s1 + $0xc] sm:$0xf]
    %v84 = vld [vmem:[%s1 + $0x10] sm:$0xf]
    %v85 = vld [vmem:[%s1 + $0x14] sm:$0xf]
    %v86 = vld [vmem:[%s1 + $0x18] sm:$0xf]
    %v87 = vld [vmem:[%s1 + $0x1c] sm:$0xf]
    %v88 = vld [vmem:[%s1 + $0x20] sm:$0xf]
    %v89 = vld [vmem:[%s1 + $0x24] sm:$0xf]
    %v90 = vld [vmem:[%s1 + $0x28] sm:$0xf]
    %v91 = vld [vmem:[%s1 + $0x2c] sm:$0xf]
    %v92 = vld [vmem:[%s1 + $0x30] sm:$0xf]
    %v93 = vld [vmem:[%s1 + $0x34] sm:$0xf]
    %v94 = vld [vmem:[%s1 + $0x38] sm:$0xf]
    %v95 = vld [vmem:[%s1 + $0x3c] sm:$0xf]
    %v96 = vld [vmem:[%s1 + $0x40] sm:$0xf]
    %v97 = vld [vmem:[%s1 + $0x44] sm:$0xf]
    %v98 = vld [vmem:[%s1 + $0x48] sm:$0xf]
    %v99 = vld [vmem:[%s1 + $0x4c] sm:$0xf]
    %v100 = vld [vmem:[%s1 + $0x50] sm:$0xf]
    %v101 = vld [vmem:[%s1 + $0x54] sm:$0xf]
    %v102 = vld [vmem:[%s1 + $0x58] sm:$0xf]
    %v103 = vld [vmem:[%s1 + $0x5c] sm:$0xf]
    %v104 = vld [vmem:[%s1 + $0x60] sm:$0xf]
    %v105 = vld [vmem:[%s1 + $0x64] sm:$0xf]
    %v106 = vld [vmem:[%s1 + $0x68] sm:$0xf]
    %v107 = vld [vmem:[%s1 + $0x6c] sm:$0xf]
    %v108 = vld [vmem:[%s1 + $0x70] sm:$0xf]
    %v109 = vld [vmem:[%s1 + $0x74] sm:$0xf]
    %v110 = vld [vmem:[%s1 + $0x78] sm:$0xf]
    %v111 = vld [vmem:[%s1 + $0x7c] sm:$0xf]
    %v112 = vld [vmem:[%s1 + $0x80] sm:$0xf]
    %v113 = vld [vmem:[%s1 + $0x84] sm:$0xf]
    %v114 = vld [vmem:[%s1 + $0x88] sm:$0xf]
    %v115 = vld [vmem:[%s1 + $0x8c] sm:$0xf]
    %v116 = vld [vmem:[%s1 + $0x90] sm:$0xf]
    %v117 = vld [vmem:[%s1 + $0x94] sm:$0xf]
    %v118 = vld [vmem:[%s1 + $0x98] sm:$0xf]
    %v119 = vld [vmem:[%s1 + $0x9c] sm:$0xf]
    %v120 = vld [vmem:[%s1 + $0xa0] sm:$0xf]
    %v121 = vld [vmem:[%s1 + $0xa4] sm:$0xf]
    %v122 = vld [vmem:[%s1 + $0xa8] sm:$0xf]
    %v123 = vld [vmem:[%s1 + $0xac] sm:$0xf]
    %v124 = vld [vmem:[%s1 + $0xb0] sm:$0xf]
    %v125 = vld [vmem:[%s1 + $0xb4] sm:$0xf]
    %v126 = vld [vmem:[%s1 + $0xb8] sm:$0xf]
    %v127 = vld [vmem:[%s1 + $0xbc] sm:$0xf]
    %v128 = vld [vmem:[%s1 + $0xc0] sm:$0xf]
    %v129 = vld [vmem:[%s1 + $0xc4] sm:$0xf]
    %v130 = vld [vmem:[%s1 + $0xc8] sm:$0xf]
    %v131 = vld [vmem:[%s1 + $0xcc] sm:$0xf]
    %v132 = vld [vmem:[%s1 + $0xd0] sm:$0xf]
    %v133 = vld [vmem:[%s1 + $0xd4] sm:$0xf]
    %v134 = vld [vmem:[%s1 + $0xd8] sm:$0xf]
    %v135 = vld [vmem:[%s1 + $0xdc] sm:$0xf]
    %v136 = vld [vmem:[%s1 + $0xe0] sm:$0xf]
    %v137 = vld [vmem:[%s1 + $0xe4] sm:$0xf]
    %v138 = vld [vmem:[%s1 + $0xe8] sm:$0xf]
    %v139 = vld [vmem:[%s1 + $0xec] sm:$0xf]
    %v140 = vld [vmem:[%s1 + $0xf0] sm:$0xf]
    %v141 = vld [vmem:[%s1 + $0xf4] sm:$0xf]
    %v142 = vld [vmem:[%s1 + $0xf8] sm:$0xf]
    %v143 = vld [vmem:[%s1 + $0xfc] sm:$0xf]
    %v144 = vld [vmem:[%s1 + $0x100] sm:$0xf]
    %v145 = vld [vmem:[%s1 + $0x104] sm:$0xf]
    %v146 = vld [vmem:[%s1 + $0x108] sm:$0xf]
    %v147 = vld [vmem:[%s1 + $0x10c] sm:$0xf]
    %v148 = vld [vmem:[%s1 + $0x110] sm:$0xf]
    %v149 = vld [vmem:[%s1 + $0x114] sm:$0xf]
    %v150 = vld [vmem:[%s1 + $0x118] sm:$0xf]
    %v151 = vld [vmem:[%s1 + $0x11c] sm:$0xf]
    %v152 = vld [vmem:[%s1 + $0x120] sm:$0xf]
    %v153 = vld [vmem:[%s1 + $0x124] sm:$0xf]
    %v154 = vld [vmem:[%s1 + $0x128] sm:$0xf]
    %v155 = vld [vmem:[%s1 + $0x12c] sm:$0xf]
    %v156 = vld [vmem:[%s1 + $0x130] sm:$0xf]
    %v157 = vld [vmem:[%s1 + $0x134] sm:$0xf]
    %v158 = vld [vmem:[%s1 + $0x138] sm:$0xf]
    %v159 = vld [vmem:[%s1 + $0x13c] sm:$0xf]
    %v160 = vld [vmem:[%s1 + $0x140] sm:$0xf]
    %v161 = vld [vmem:[%s1 + $0x144] sm:$0xf]
    %v162 = vld [vmem:[%s1 + $0x148] sm:$0xf]
    %v163 = vld [vmem:[%s1 + $0x14c] sm:$0xf]
    %v164 = vld [vmem:[%s1 + $0x150] sm:$0xf]
    %v165 = vld [vmem:[%s1 + $0x154] sm:$0xf]
    %v166 = vld [vmem:[%s1 + $0x158] sm:$0xf]
    %v167 = vld [vmem:[%s1 + $0x15c] sm:$0xf]
    %v168 = vld [vmem:[%s1 + $0x160] sm:$0xf]
    %v169 = vld [vmem:[%s1 + $0x164] sm:$0xf]
    %v170 = vld [vmem:[%s1 + $0x168] sm:$0xf]
    %v171 = vld [vmem:[%s1 + $0x16c] sm:$0xf]
    %v172 = vld [vmem:[%s1 + $0x170] sm:$0xf]
    %v173 = vld [vmem:[%s1 + $0x174] sm:$0xf]
    %v174 = vld [vmem:[%s1 + $0x178] sm:$0xf]
    %v175 = vld [vmem:[%s1 + $0x17c] sm:$0xf]
    %v176 = vld [vmem:[%s1 + $0x180] sm:$0xf]
    %v177 = vld [vmem:[%s1 + $0x184] sm:$0xf]
    %v178 = vld [vmem:[%s1 + $0x188] sm:$0xf]
    %v179 = vld [vmem:[%s1 + $0x18c] sm:$0xf]
    %v180 = vld [vmem:[%s1 + $0x190] sm:$0xf]
    %v181 = vld [vmem:[%s1 + $0x194] sm:$0xf]
    %v182 = vld [vmem:[%s1 + $0x198] sm:$0xf]
    %v183 = vld [vmem:[%s1 + $0x19c] sm:$0xf]
    %v184 = vld [vmem:[%s1 + $0x1a0] sm:$0xf]
    %v185 = vld [vmem:[%s1 + $0x1a4] sm:$0xf]
    %v186 = vld [vmem:[%s1 + $0x1a8] sm:$0xf]
    %v187 = vld [vmem:[%s1 + $0x1ac] sm:$0xf]
    %v188 = vld [vmem:[%s1 + $0x1b0] sm:$0xf]
    %v189 = vld [vmem:[%s1 + $0x1b4] sm:$0xf]
    %v190 = vld [vmem:[%s1 + $0x1b8] sm:$0xf]
    %v191 = vld [vmem:[%s1 + $0x1bc] sm:$0xf]
    %v192 = vld [vmem:[%s1 + $0x1c0] sm:$0xf]
    %v193 = vld [vmem:[%s1 + $0x1c4] sm:$0xf]
    %v194 = vld [vmem:[%s1 + $0x1c8] sm:$0xf]
    %v195 = vld [vmem:[%s1 + $0x1cc] sm:$0xf]
    %v196 = vld [vmem:[%s1 + $0x1d0] sm:$0xf]
    %v197 = vld [vmem:[%s1 + $0x1d4] sm:$0xf]
    %v198 = vld [vmem:[%s1 + $0x1d8] sm:$0xf]
    %v199 = vld [vmem:[%s1 + $0x1dc] sm:$0xf]
    %v200 = vld [vmem:[%s1 + $0x1e0] sm:$0xf]
    %v201 = vld [vmem:[%s1 + $0x1e4] sm:$0xf]
    %v202 = vld [vmem:[%s1 + $0x1e8] sm:$0xf]
    %v203 = vld [vmem:[%s1 + $0x1ec] sm:$0xf]
    %v204 = vld [vmem:[%s1 + $0x1f0] sm:$0xf]
    %v205 = vld [vmem:[%s1 + $0x1f4] sm:$0xf]
    %v206 = vld [vmem:[%s1 + $0x1f8] sm:$0xf]
    %v207 = vld [vmem:[%s1 + $0x1fc] sm:$0xf]
    %v208 = vlaneseq
    %v209 = vshrl.u32 %v208, 7
    %v210 = vsub.s32 0, %v209
    %v211 = vrot.slane %v25, %v210
    %v340 = vunpack.c.l.b16 %v80
    %v341 = vunpack.c.l.b16 %v81
    %v342 = vunpack.c.l.b16 %v82
    %v343 = vunpack.c.l.b16 %v83
    %v344 = vunpack.c.l.b16 %v84
    %v345 = vunpack.c.l.b16 %v85
    %v346 = vunpack.c.l.b16 %v86
    %v347 = vunpack.c.l.b16 %v87
    %v348 = vunpack.c.l.b16 %v88
    %v349 = vunpack.c.l.b16 %v89
    %v350 = vunpack.c.l.b16 %v90
    %v351 = vunpack.c.l.b16 %v91
    %v352 = vunpack.c.l.b16 %v92
    %v353 = vunpack.c.l.b16 %v93
    %v354 = vunpack.c.l.b16 %v94
    %v355 = vunpack.c.l.b16 %v95
    %v356 = vunpack.c.l.b16 %v96
    %v357 = vunpack.c.l.b16 %v97
    %v358 = vunpack.c.l.b16 %v98
    %v359 = vunpack.c.l.b16 %v99
    %v360 = vunpack.c.l.b16 %v100
    %v361 = vunpack.c.l.b16 %v101
    %v362 = vunpack.c.l.b16 %v102
    %v363 = vunpack.c.l.b16 %v103
    %v364 = vunpack.c.l.b16 %v104
    %v365 = vunpack.c.l.b16 %v105
    %v366 = vunpack.c.l.b16 %v106
    %v367 = vunpack.c.l.b16 %v107
    %v368 = vunpack.c.l.b16 %v108
    %v369 = vunpack.c.l.b16 %v109
    %v370 = vunpack.c.l.b16 %v110
    %v371 = vunpack.c.l.b16 %v111
    %v372 = vunpack.c.l.b16 %v112
    %v373 = vunpack.c.l.b16 %v113
    %v374 = vunpack.c.l.b16 %v114
    %v375 = vunpack.c.l.b16 %v115
    %v376 = vunpack.c.l.b16 %v116
    %v377 = vunpack.c.l.b16 %v117
    %v378 = vunpack.c.l.b16 %v118
    %v379 = vunpack.c.l.b16 %v119
    %v380 = vunpack.c.l.b16 %v120
    %v381 = vunpack.c.l.b16 %v121
    %v382 = vunpack.c.l.b16 %v122
    %v383 = vunpack.c.l.b16 %v123
    %v384 = vunpack.c.l.b16 %v124
    %v385 = vunpack.c.l.b16 %v125
    %v386 = vunpack.c.l.b16 %v126
    %v387 = vunpack.c.l.b16 %v127
    %v388 = vunpack.c.l.b16 %v128
    %v389 = vunpack.c.l.b16 %v129
    %v390 = vunpack.c.l.b16 %v130
    %v391 = vunpack.c.l.b16 %v131
    %v392 = vunpack.c.l.b16 %v132
    %v393 = vunpack.c.l.b16 %v133
    %v394 = vunpack.c.l.b16 %v134
    %v395 = vunpack.c.l.b16 %v135
    %v396 = vunpack.c.l.b16 %v136
    %v397 = vunpack.c.l.b16 %v137
    %v398 = vunpack.c.l.b16 %v138
    %v399 = vunpack.c.l.b16 %v139
    %v400 = vunpack.c.l.b16 %v140
    %v401 = vunpack.c.l.b16 %v141
    %v402 = vunpack.c.l.b16 %v142
    %v403 = vunpack.c.l.b16 %v143
    %v404 = vunpack.c.l.b16 %v144
    %v405 = vunpack.c.l.b16 %v145
    %v406 = vunpack.c.l.b16 %v146
    %v407 = vunpack.c.l.b16 %v147
    %v408 = vunpack.c.l.b16 %v148
    %v409 = vunpack.c.l.b16 %v149
    %v410 = vunpack.c.l.b16 %v150
    %v411 = vunpack.c.l.b16 %v151
    %v412 = vunpack.c.l.b16 %v152
    %v413 = vunpack.c.l.b16 %v153
    %v414 = vunpack.c.l.b16 %v154
    %v415 = vunpack.c.l.b16 %v155
    %v416 = vunpack.c.l.b16 %v156
    %v417 = vunpack.c.l.b16 %v157
    %v418 = vunpack.c.l.b16 %v158
    %v419 = vunpack.c.l.b16 %v159
    %v420 = vunpack.c.l.b16 %v160
    %v421 = vunpack.c.l.b16 %v161
    %v422 = vunpack.c.l.b16 %v162
    %v423 = vunpack.c.l.b16 %v163
    %v424 = vunpack.c.l.b16 %v164
    %v425 = vunpack.c.l.b16 %v165
    %v426 = vunpack.c.l.b16 %v166
    %v427 = vunpack.c.l.b16 %v167
    %v428 = vunpack.c.l.b16 %v168
    %v429 = vunpack.c.l.b16 %v169
    %v430 = vunpack.c.l.b16 %v170
    %v431 = vunpack.c.l.b16 %v171
    %v432 = vunpack.c.l.b16 %v172
    %v433 = vunpack.c.l.b16 %v173
    %v434 = vunpack.c.l.b16 %v174
    %v435 = vunpack.c.l.b16 %v175
    %v436 = vunpack.c.l.b16 %v176
    %v437 = vunpack.c.l.b16 %v177
    %v438 = vunpack.c.l.b16 %v178
    %v439 = vunpack.c.l.b16 %v179
    %v440 = vunpack.c.l.b16 %v180
    %v441 = vunpack.c.l.b16 %v181
    %v442 = vunpack.c.l.b16 %v182
    %v443 = vunpack.c.l.b16 %v183
    %v444 = vunpack.c.l.b16 %v184
    %v445 = vunpack.c.l.b16 %v185
    %v446 = vunpack.c.l.b16 %v186
    %v447 = vunpack.c.l.b16 %v187
    %v448 = vunpack.c.l.b16 %v188
    %v449 = vunpack.c.l.b16 %v189
    %v450 = vunpack.c.l.b16 %v190
    %v451 = vunpack.c.l.b16 %v191
    %v452 = vunpack.c.l.b16 %v192
    %v453 = vunpack.c.l.b16 %v193
    %v454 = vunpack.c.l.b16 %v194
    %v455 = vunpack.c.l.b16 %v195
    %v456 = vunpack.c.l.b16 %v196
    %v457 = vunpack.c.l.b16 %v197
    %v458 = vunpack.c.l.b16 %v198
    %v459 = vunpack.c.l.b16 %v199
    %v460 = vunpack.c.l.b16 %v200
    %v461 = vunpack.c.l.b16 %v201
    %v462 = vunpack.c.l.b16 %v202
    %v463 = vunpack.c.l.b16 %v203
    %v464 = vunpack.c.l.b16 %v204
    %v465 = vunpack.c.l.b16 %v205
    %v466 = vunpack.c.l.b16 %v206
    %v467 = vunpack.c.l.b16 %v207
    %v468 = vpack.c.b16 %v341, %v340
    %v469 = vpack.c.b16 %v343, %v342
    %v470 = vpack.c.b16 %v345, %v344
    %v471 = vpack.c.b16 %v347, %v346
    %v472 = vpack.c.b16 %v349, %v348
    %v473 = vpack.c.b16 %v351, %v350
    %v474 = vpack.c.b16 %v353, %v352
    %v475 = vpack.c.b16 %v355, %v354
    %v476 = vpack.c.b16 %v357, %v356
    %v477 = vpack.c.b16 %v359, %v358
    %v478 = vpack.c.b16 %v361, %v360
    %v479 = vpack.c.b16 %v363, %v362
    %v480 = vpack.c.b16 %v365, %v364
    %v481 = vpack.c.b16 %v367, %v366
    %v482 = vpack.c.b16 %v369, %v368
    %v483 = vpack.c.b16 %v371, %v370
    %v484 = vpack.c.b16 %v373, %v372
    %v485 = vpack.c.b16 %v375, %v374
    %v486 = vpack.c.b16 %v377, %v376
    %v487 = vpack.c.b16 %v379, %v378
    %v488 = vpack.c.b16 %v381, %v380
    %v489 = vpack.c.b16 %v383, %v382
    %v490 = vpack.c.b16 %v385, %v384
    %v491 = vpack.c.b16 %v387, %v386
    %v492 = vpack.c.b16 %v389, %v388
    %v493 = vpack.c.b16 %v391, %v390
    %v494 = vpack.c.b16 %v393, %v392
    %v495 = vpack.c.b16 %v395, %v394
    %v496 = vpack.c.b16 %v397, %v396
    %v497 = vpack.c.b16 %v399, %v398
    %v498 = vpack.c.b16 %v401, %v400
    %v499 = vpack.c.b16 %v403, %v402
    %v500 = vpack.c.b16 %v405, %v404
    %v501 = vpack.c.b16 %v407, %v406
    %v502 = vpack.c.b16 %v409, %v408
    %v503 = vpack.c.b16 %v411, %v410
    %v504 = vpack.c.b16 %v413, %v412
    %v505 = vpack.c.b16 %v415, %v414
    %v506 = vpack.c.b16 %v417, %v416
    %v507 = vpack.c.b16 %v419, %v418
    %v508 = vpack.c.b16 %v421, %v420
    %v509 = vpack.c.b16 %v423, %v422
    %v510 = vpack.c.b16 %v425, %v424
    %v511 = vpack.c.b16 %v427, %v426
    %v512 = vpack.c.b16 %v429, %v428
    %v513 = vpack.c.b16 %v431, %v430
    %v514 = vpack.c.b16 %v433, %v432
    %v515 = vpack.c.b16 %v435, %v434
    %v516 = vpack.c.b16 %v437, %v436
    %v517 = vpack.c.b16 %v439, %v438
    %v518 = vpack.c.b16 %v441, %v440
    %v519 = vpack.c.b16 %v443, %v442
    %v520 = vpack.c.b16 %v445, %v444
    %v521 = vpack.c.b16 %v447, %v446
    %v522 = vpack.c.b16 %v449, %v448
    %v523 = vpack.c.b16 %v451, %v450
    %v524 = vpack.c.b16 %v453, %v452
    %v525 = vpack.c.b16 %v455, %v454
    %v526 = vpack.c.b16 %v457, %v456
    %v527 = vpack.c.b16 %v459, %v458
    %v528 = vpack.c.b16 %v461, %v460
    %v529 = vpack.c.b16 %v463, %v462
    %v530 = vpack.c.b16 %v465, %v464
    %v531 = vpack.c.b16 %v467, %v466
    %596 = vmatprep.subr.bf16.mxu0 0
    %597 = vmatpush1.bf16.msra.mxu0 %v475
    %598 = vmatprep.subr.bf16.mxu0 0
    %599 = vmatpush1.bf16.msra.mxu0 %v474
    %600 = vmatprep.subr.bf16.mxu0 0
    %601 = vmatpush1.bf16.msra.mxu0 %v473
    %602 = vmatprep.subr.bf16.mxu0 0
    %603 = vmatpush1.bf16.msra.mxu0 %v472
    %604 = vmatprep.subr.bf16.mxu0 0
    %605 = vmatpush1.bf16.msra.mxu0 %v471
    %606 = vmatprep.subr.bf16.mxu0 0
    %607 = vmatpush1.bf16.msra.mxu0 %v470
    %608 = vmatprep.subr.bf16.mxu0 0
    %609 = vmatpush1.bf16.msra.mxu0 %v469
    %610 = vmatprep.subr.bf16.mxu0 0
    %611 = vmatpush1.bf16.msra.mxu0 %v468
    %612 = vmatprep.subr.bf16.mxu0 0
    %613 = vmatpush2.bf16.msra.mxu0 %v483
    %614 = vmatprep.subr.bf16.mxu0 0
    %615 = vmatpush2.bf16.msra.mxu0 %v482
    %616 = vmatprep.subr.bf16.mxu0 0
    %617 = vmatpush2.bf16.msra.mxu0 %v481
    %618 = vmatprep.subr.bf16.mxu0 0
    %619 = vmatpush2.bf16.msra.mxu0 %v480
    %620 = vmatprep.subr.bf16.mxu0 0
    %621 = vmatpush2.bf16.msra.mxu0 %v479
    %622 = vmatprep.subr.bf16.mxu0 0
    %623 = vmatpush2.bf16.msra.mxu0 %v478
    %624 = vmatprep.subr.bf16.mxu0 0
    %625 = vmatpush2.bf16.msra.mxu0 %v477
    %626 = vmatprep.subr.bf16.mxu0 0
    %627 = vmatpush2.bf16.msra.mxu0 %v476
    %628 = vmatprep.mubr.bf16.mxu0 %v73
    %629 = vmatmul.mubr.bf16.gmra.mxu0 %v72
    %v630 = vpop.f32.mrf.mxu0
    %v631 = vadd.f32 %v211, %v630
    %v632 = vpop.f32.mrf.mxu0
    %v633 = vpop.f32.mrf.mxu0
    %v634 = vpop.f32.mrf.mxu0
    %635 = vdwg.mxu0
    %636 = vmatprep.subr.bf16.mxu0 0
    %637 = vmatpush1.bf16.msra.mxu0 %v491
    %638 = vmatprep.subr.bf16.mxu0 0
    %639 = vmatpush1.bf16.msra.mxu0 %v490
    %640 = vmatprep.subr.bf16.mxu0 0
    %641 = vmatpush1.bf16.msra.mxu0 %v489
    %642 = vmatprep.subr.bf16.mxu0 0
    %643 = vmatpush1.bf16.msra.mxu0 %v488
    %644 = vmatprep.subr.bf16.mxu0 0
    %645 = vmatpush1.bf16.msra.mxu0 %v487
    %646 = vmatprep.subr.bf16.mxu0 0
    %647 = vmatpush1.bf16.msra.mxu0 %v486
    %648 = vmatprep.subr.bf16.mxu0 0
    %649 = vmatpush1.bf16.msra.mxu0 %v485
    %650 = vmatprep.subr.bf16.mxu0 0
    %651 = vmatpush1.bf16.msra.mxu0 %v484
    %652 = vmatprep.subr.bf16.mxu0 0
    %653 = vmatpush2.bf16.msra.mxu0 %v499
    %654 = vmatprep.subr.bf16.mxu0 0
    %655 = vmatpush2.bf16.msra.mxu0 %v498
    %656 = vmatprep.subr.bf16.mxu0 0
    %657 = vmatpush2.bf16.msra.mxu0 %v497
    %658 = vmatprep.subr.bf16.mxu0 0
    %659 = vmatpush2.bf16.msra.mxu0 %v496
    %660 = vmatprep.subr.bf16.mxu0 0
    %661 = vmatpush2.bf16.msra.mxu0 %v495
    %662 = vmatprep.subr.bf16.mxu0 0
    %663 = vmatpush2.bf16.msra.mxu0 %v494
    %664 = vmatprep.subr.bf16.mxu0 0
    %665 = vmatpush2.bf16.msra.mxu0 %v493
    %666 = vmatprep.subr.bf16.mxu0 0
    %667 = vmatpush2.bf16.msra.mxu0 %v492
    %668 = vmatprep.mubr.bf16.mxu0 %v75
    %669 = vmatmul.mubr.bf16.gmra.mxu0 %v74
    %v670 = vpop.f32.mrf.mxu0
    %v671 = vadd.f32 %v631, %v670
    %v672 = vpop.f32.mrf.mxu0
    %v673 = vpop.f32.mrf.mxu0
    %v674 = vpop.f32.mrf.mxu0
    %675 = vdwg.mxu0
    %676 = vmatprep.subr.bf16.mxu0 0
    %677 = vmatpush1.bf16.msra.mxu0 %v507
    %678 = vmatprep.subr.bf16.mxu0 0
    %679 = vmatpush1.bf16.msra.mxu0 %v506
    %680 = vmatprep.subr.bf16.mxu0 0
    %681 = vmatpush1.bf16.msra.mxu0 %v505
    %682 = vmatprep.subr.bf16.mxu0 0
    %683 = vmatpush1.bf16.msra.mxu0 %v504
    %684 = vmatprep.subr.bf16.mxu0 0
    %685 = vmatpush1.bf16.msra.mxu0 %v503
    %686 = vmatprep.subr.bf16.mxu0 0
    %687 = vmatpush1.bf16.msra.mxu0 %v502
    %688 = vmatprep.subr.bf16.mxu0 0
    %689 = vmatpush1.bf16.msra.mxu0 %v501
    %690 = vmatprep.subr.bf16.mxu0 0
    %691 = vmatpush1.bf16.msra.mxu0 %v500
    %692 = vmatprep.subr.bf16.mxu0 0
    %693 = vmatpush2.bf16.msra.mxu0 %v515
    %694 = vmatprep.subr.bf16.mxu0 0
    %695 = vmatpush2.bf16.msra.mxu0 %v514
    %696 = vmatprep.subr.bf16.mxu0 0
    %697 = vmatpush2.bf16.msra.mxu0 %v513
    %698 = vmatprep.subr.bf16.mxu0 0
    %699 = vmatpush2.bf16.msra.mxu0 %v512
    %700 = vmatprep.subr.bf16.mxu0 0
    %701 = vmatpush2.bf16.msra.mxu0 %v511
    %702 = vmatprep.subr.bf16.mxu0 0
    %703 = vmatpush2.bf16.msra.mxu0 %v510
    %704 = vmatprep.subr.bf16.mxu0 0
    %705 = vmatpush2.bf16.msra.mxu0 %v509
    %706 = vmatprep.subr.bf16.mxu0 0
    %707 = vmatpush2.bf16.msra.mxu0 %v508
    %708 = vmatprep.mubr.bf16.mxu0 %v77
    %709 = vmatmul.mubr.bf16.gmra.mxu0 %v76
    %v710 = vpop.f32.mrf.mxu0
    %v711 = vadd.f32 %v671, %v710
    %v712 = vpop.f32.mrf.mxu0
    %v713 = vpop.f32.mrf.mxu0
    %v714 = vpop.f32.mrf.mxu0
    %715 = vdwg.mxu0
    %716 = vmatprep.subr.bf16.mxu0 0
    %717 = vmatpush1.bf16.msra.mxu0 %v523
    %718 = vmatprep.subr.bf16.mxu0 0
    %719 = vmatpush1.bf16.msra.mxu0 %v522
    %720 = vmatprep.subr.bf16.mxu0 0
    %721 = vmatpush1.bf16.msra.mxu0 %v521
    %722 = vmatprep.subr.bf16.mxu0 0
    %723 = vmatpush1.bf16.msra.mxu0 %v520
    %724 = vmatprep.subr.bf16.mxu0 0
    %725 = vmatpush1.bf16.msra.mxu0 %v519
    %726 = vmatprep.subr.bf16.mxu0 0
    %727 = vmatpush1.bf16.msra.mxu0 %v518
    %728 = vmatprep.subr.bf16.mxu0 0
    %729 = vmatpush1.bf16.msra.mxu0 %v517
    %730 = vmatprep.subr.bf16.mxu0 0
    %731 = vmatpush1.bf16.msra.mxu0 %v516
    %732 = vmatprep.subr.bf16.mxu0 0
    %733 = vmatpush2.bf16.msra.mxu0 %v531
    %734 = vmatprep.subr.bf16.mxu0 0
    %735 = vmatpush2.bf16.msra.mxu0 %v530
    %736 = vmatprep.subr.bf16.mxu0 0
    %737 = vmatpush2.bf16.msra.mxu0 %v529
    %738 = vmatprep.subr.bf16.mxu0 0
    %739 = vmatpush2.bf16.msra.mxu0 %v528
    %740 = vmatprep.subr.bf16.mxu0 0
    %741 = vmatpush2.bf16.msra.mxu0 %v527
    %742 = vmatprep.subr.bf16.mxu0 0
    %743 = vmatpush2.bf16.msra.mxu0 %v526
    %744 = vmatprep.subr.bf16.mxu0 0
    %745 = vmatpush2.bf16.msra.mxu0 %v525
    %746 = vmatprep.subr.bf16.mxu0 0
    %747 = vmatpush2.bf16.msra.mxu0 %v524
    %748 = vmatprep.mubr.bf16.mxu0 %v79
    %749 = vmatmul.mubr.bf16.gmra.mxu0 %v78
    %v750 = vpop.f32.mrf.mxu0
    %v751 = vadd.f32 %v711, %v750
    %v752 = vpop.f32.mrf.mxu0
    %v753 = vpop.f32.mrf.mxu0
    %v754 = vpop.f32.mrf.mxu0
    %755 = vdwg.mxu0
    %v756 = vmax.f32 %v751, 0.0
    %vm757 = vcmask 517120
    %758 = vst.msk [vmem:[#allocation4] sm:$0x3] %vm757, %v756
    %v759 = vpack.c.bf16 %v756, %v756
    %v760 = vld [vmem:[%s2] sm:$0xf]
    %v761 = vld [vmem:[%s2 + $0x4] sm:$0xf]
    %v762 = vld [vmem:[%s2 + $0x8] sm:$0xf]
    %v763 = vld [vmem:[%s2 + $0xc] sm:$0xf]
    %v764 = vld [vmem:[%s2 + $0x10] sm:$0xf]
    %v765 = vld [vmem:[%s2 + $0x14] sm:$0xf]
    %v766 = vld [vmem:[%s2 + $0x18] sm:$0xf]
    %v767 = vld [vmem:[%s2 + $0x1c] sm:$0xf]
    %v776 = vunpack.c.l.b16 %v760
    %v777 = vunpack.c.l.b16 %v761
    %v778 = vunpack.c.l.b16 %v762
    %v779 = vunpack.c.l.b16 %v763
    %v780 = vunpack.c.l.b16 %v764
    %v781 = vunpack.c.l.b16 %v765
    %v782 = vunpack.c.l.b16 %v766
    %v783 = vunpack.c.l.b16 %v767
    %v784 = vpack.c.b16 %v777, %v776
    %v785 = vpack.c.b16 %v779, %v778
    %v786 = vpack.c.b16 %v781, %v780
    %v787 = vpack.c.b16 %v783, %v782
    %vm792 = vcmask 523264
    %v794 = vsel %vm792, %v759, 0
    %796 = vmatprep.subr.bf16.mxu0 0
    %797 = vmatpush1.bf16.msra.mxu0 0
    %798 = vmatprep.subr.bf16.mxu0 0
    %799 = vmatpush1.bf16.msra.mxu0 0
    %800 = vmatprep.subr.bf16.mxu0 0
    %801 = vmatpush1.bf16.msra.mxu0 0
    %802 = vmatprep.subr.bf16.mxu0 0
    %803 = vmatpush1.bf16.msra.mxu0 0
    %804 = vmatprep.subr.bf16.mxu0 0
    %805 = vmatpush1.bf16.msra.mxu0 %v787
    %806 = vmatprep.subr.bf16.mxu0 0
    %807 = vmatpush1.bf16.msra.mxu0 %v786
    %808 = vmatprep.subr.bf16.mxu0 0
    %809 = vmatpush1.bf16.msra.mxu0 %v785
    %810 = vmatprep.subr.bf16.mxu0 0
    %811 = vmatpush1.bf16.msra.mxu0 %v784
    %812 = vmatprep.subr.bf16.mxu0 0
    %813 = vmatpush2.bf16.msra.mxu0 0
    %814 = vmatprep.subr.bf16.mxu0 0
    %815 = vmatpush2.bf16.msra.mxu0 0
    %816 = vmatprep.subr.bf16.mxu0 0
    %817 = vmatpush2.bf16.msra.mxu0 0
    %818 = vmatprep.subr.bf16.mxu0 0
    %819 = vmatpush2.bf16.msra.mxu0 0
    %820 = vmatprep.subr.bf16.mxu0 0
    %821 = vmatpush2.bf16.msra.mxu0 0
    %822 = vmatprep.subr.bf16.mxu0 0
    %823 = vmatpush2.bf16.msra.mxu0 0
    %824 = vmatprep.subr.bf16.mxu0 0
    %825 = vmatpush2.bf16.msra.mxu0 0
    %826 = vmatprep.subr.bf16.mxu0 0
    %827 = vmatpush2.bf16.msra.mxu0 0
    %828 = vmatprep.mubr.bf16.mxu0 0
    %829 = vmatmul.mubr.bf16.gmra.mxu0 %v794
    %v830 = vpop.f32.mrf.mxu0
    %v831 = vadd.f32 0.0, %v830
    %v832 = vpop.f32.mrf.mxu0
    %v833 = vpop.f32.mrf.mxu0
    %v834 = vpop.f32.mrf.mxu0
    %835 = vdwg.mxu0
    %vm836 = vcmask 1041408
    %v837 = vsel %vm836, %v831, 0.0
    %v838 = vrot.slane %v837, 4
    %v839 = vadd.f32 %v837, %v838
    %v840 = vrot.slane %v839, 2
    %v841 = vadd.f32 %v839, %v840
    %v842 = vrot.slane %v841, 1
    %v843 = vadd.f32 %v841, %v842
    %v844 = vrcp.pop 2.0
    %v845 = vmul.f32 %v843, %v844
    %v846 = vsub.f32 %v831, %v845
    %v847 = vmul.f32 %v846, %v846
    %v848 = vsel %vm836, %v847, 0.0
    %v849 = vrot.slane %v848, 4
    %v850 = vadd.f32 %v848, %v849
    %v851 = vrot.slane %v850, 2
    %v852 = vadd.f32 %v850, %v851
    %v853 = vrot.slane %v852, 1
    %v854 = vadd.f32 %v852, %v853
    %v855 = vmul.f32 %v854, %v844
    %v856 = vadd.f32 %v855, 1e-05
    %v857 = vrsqrt.pop %v856
    %v858 = vmul.f32 %v25, %v857
    %v859 = vmul.f32 %v845, %v858
    %v861 = vrot.slane %v859, 7
    %v863 = vsub.f32 %v25, %v861
    %v864 = vlaneseq
    %v865 = vshrl.u32 %v864, 7
    %v866 = vsub.s32 1, %v865
    %v867 = vrot.slane %v858, %v866
    %v868 = vmul.f32 %v831, %v867
    %v869 = vlaneseq
    %v870 = vshrl.u32 %v869, 7
    %v871 = vsub.s32 2, %v870
    %v872 = vrot.slane %v863, %v871
    %v873 = vadd.f32 %v868, %v872
    %v874 = vmax.f32 %v873, 0.0
    %v875 = vpack.c.bf16 %v874, %v874
    %v876 = vld [vmem:[%s3] sm:$0xf]
    %v877 = vld [vmem:[%s3 + $0x4] sm:$0xf]
    %v878 = vld [vmem:[%s3 + $0x8] sm:$0xf]
    %v879 = vld [vmem:[%s3 + $0xc] sm:$0xf]
    %v880 = vld [vmem:[%s3 + $0x10] sm:$0xf]
    %v881 = vld [vmem:[%s3 + $0x14] sm:$0xf]
    %v882 = vld [vmem:[%s3 + $0x18] sm:$0xf]
    %v883 = vld [vmem:[%s3 + $0x1c] sm:$0xf]
    %v884 = vld [vmem:[%s3 + $0x20] sm:$0xf]
    %v885 = vld [vmem:[%s3 + $0x24] sm:$0xf]
    %v886 = vld [vmem:[%s3 + $0x28] sm:$0xf]
    %v887 = vld [vmem:[%s3 + $0x2c] sm:$0xf]
    %v888 = vld [vmem:[%s3 + $0x30] sm:$0xf]
    %v889 = vld [vmem:[%s3 + $0x34] sm:$0xf]
    %v890 = vld [vmem:[%s3 + $0x38] sm:$0xf]
    %v891 = vld [vmem:[%s3 + $0x3c] sm:$0xf]
    %v892 = vlaneseq
    %v893 = vshrl.u32 %v892, 7
    %v894 = vsub.s32 3, %v893
    %v895 = vrot.slane %v25, %v894
    %v912 = vunpack.c.l.b16 %v876
    %v913 = vunpack.c.l.b16 %v877
    %v914 = vunpack.c.l.b16 %v878
    %v915 = vunpack.c.l.b16 %v879
    %v916 = vunpack.c.l.b16 %v880
    %v917 = vunpack.c.l.b16 %v881
    %v918 = vunpack.c.l.b16 %v882
    %v919 = vunpack.c.l.b16 %v883
    %v920 = vunpack.c.l.b16 %v884
    %v921 = vunpack.c.l.b16 %v885
    %v922 = vunpack.c.l.b16 %v886
    %v923 = vunpack.c.l.b16 %v887
    %v924 = vunpack.c.l.b16 %v888
    %v925 = vunpack.c.l.b16 %v889
    %v926 = vunpack.c.l.b16 %v890
    %v927 = vunpack.c.l.b16 %v891
    %v928 = vpack.c.b16 %v913, %v912
    %v929 = vpack.c.b16 %v915, %v914
    %v930 = vpack.c.b16 %v917, %v916
    %v931 = vpack.c.b16 %v919, %v918
    %v932 = vpack.c.b16 %v921, %v920
    %v933 = vpack.c.b16 %v923, %v922
    %v934 = vpack.c.b16 %v925, %v924
    %v935 = vpack.c.b16 %v927, %v926
    %944 = vmatprep.subr.bf16.mxu0 0
    %945 = vmatpush1.bf16.msra.mxu0 %v935
    %946 = vmatprep.subr.bf16.mxu0 0
    %947 = vmatpush1.bf16.msra.mxu0 %v934
    %948 = vmatprep.subr.bf16.mxu0 0
    %949 = vmatpush1.bf16.msra.mxu0 %v933
    %950 = vmatprep.subr.bf16.mxu0 0
    %951 = vmatpush1.bf16.msra.mxu0 %v932
    %952 = vmatprep.subr.bf16.mxu0 0
    %953 = vmatpush1.bf16.msra.mxu0 %v931
    %954 = vmatprep.subr.bf16.mxu0 0
    %955 = vmatpush1.bf16.msra.mxu0 %v930
    %956 = vmatprep.subr.bf16.mxu0 0
    %957 = vmatpush1.bf16.msra.mxu0 %v929
    %958 = vmatprep.subr.bf16.mxu0 0
    %959 = vmatpush1.bf16.msra.mxu0 %v928
    %960 = vmatprep.subr.bf16.mxu0 0
    %961 = vmatpush2.bf16.msra.mxu0 0
    %962 = vmatprep.subr.bf16.mxu0 0
    %963 = vmatpush2.bf16.msra.mxu0 0
    %964 = vmatprep.subr.bf16.mxu0 0
    %965 = vmatpush2.bf16.msra.mxu0 0
    %966 = vmatprep.subr.bf16.mxu0 0
    %967 = vmatpush2.bf16.msra.mxu0 0
    %968 = vmatprep.subr.bf16.mxu0 0
    %969 = vmatpush2.bf16.msra.mxu0 0
    %970 = vmatprep.subr.bf16.mxu0 0
    %971 = vmatpush2.bf16.msra.mxu0 0
    %972 = vmatprep.subr.bf16.mxu0 0
    %973 = vmatpush2.bf16.msra.mxu0 0
    %974 = vmatprep.subr.bf16.mxu0 0
    %975 = vmatpush2.bf16.msra.mxu0 0
    %976 = vmatprep.mubr.bf16.mxu0 0
    %977 = vmatmul.mubr.bf16.gmra.mxu0 %v875
    %v978 = vpop.f32.mrf.mxu0
    %v979 = vadd.f32 %v895, %v978
    %v980 = vpop.f32.mrf.mxu0
    %v981 = vpop.f32.mrf.mxu0
    %v982 = vpop.f32.mrf.mxu0
    %983 = vdwg.mxu0
    %vm984 = vcmask 254976
    %985 = vst.msk [vmem:[#allocation2] sm:$0x3] %vm984, %v979
    // Predicated region
    $region22: #{netwrapper_forward.1} parent=1 // pred_check
      _
    $region23: #{netwrapper_forward.1} parent=1 // pred_check_branch
      %987 = sbr.rel (0) target = $region25
    $region24: #{netwrapper_forward.1} parent=1 // pred_region
      %s989 = ssub.s32 32, 32
      %990 = vsyncadd [#allocation3], %s989
      %s992 = sshll.u32 [#allocation2], 4
      %s993 = int_to_ptr.vmem [resolvable:$true] %s992
      %995 = dma.vmem_to_hbm [thread:$0]  %s993, 32, %s5, [#allocation3]
    $region25: #{netwrapper_forward.1} parent=1 // pred_fallthru
      _
    // Predicated region
    $region26: #{netwrapper_forward.1} parent=1 // pred_check
      _
    $region27: #{netwrapper_forward.1} parent=1 // pred_check_branch
      %997 = sbr.rel (0) target = $region29
    $region28: #{netwrapper_forward.1} parent=1 // pred_region
      %s999 = ssub.s32 32, 32
      %1000 = vsyncadd [#allocation5], %s999
      %s1002 = sshll.u32 [#allocation4], 4
      %s1003 = int_to_ptr.vmem [resolvable:$true] %s1002
      %1005 = dma.vmem_to_hbm [thread:$0]  %s1003, 32, %s6, [#allocation5]
    $region29: #{netwrapper_forward.1} parent=1 // pred_fallthru
      _
    // Predicated region
    $region30: #{netwrapper_forward.1} parent=1 // pred_check
      _
    $region31: #{netwrapper_forward.1} parent=1 // pred_check_branch
      %1007 = sbr.rel (0) target = $region33
    $region32: #{netwrapper_forward.1} parent=1 // pred_region
      %1008 = dma.done [#allocation3], 32
    $region33: #{netwrapper_forward.1} parent=1 // pred_fallthru
      _
    // Predicated region
    $region34: #{netwrapper_forward.1} parent=1 // pred_check
      _
    $region35: #{netwrapper_forward.1} parent=1 // pred_check_branch
      %1010 = sbr.rel (0) target = $region37
    $region36: #{netwrapper_forward.1} parent=1 // pred_region
      %1011 = dma.done [#allocation5], 32
    $region37: #{netwrapper_forward.1} parent=1 // pred_fallthru
      _
    %1012 = vsyncpa [#allocation3], 1
    %1013 = vsyncpa [#allocation5], 1

</llo_original>
